<compile_context>
chip_gen: v6e
topology: v6e:2x2x1
jax: 0.10.0
libtpu: 0.0.40
codegen_flags: <defaults>
</compile_context>

<pallas_src>
import functools
import math

import jax
import jax.numpy as jnp
from jax.experimental import pallas as pl
from jax.experimental.pallas import tpu as pltpu


def make_positional_encoding_table(d_model: int, max_len: int = 5000) -> jnp.ndarray:
    """Deterministic sinusoidal table, identical to the PyTorch __init__."""
    position = jnp.arange(0, max_len, dtype=jnp.float32)[:, None]              # [max_len, 1]
    div_term = jnp.exp(
        jnp.arange(0, d_model, 2, dtype=jnp.float32) * (-math.log(10000.0) / d_model)
    )                                                                           # [d_model//2]
    pe = jnp.zeros((max_len, d_model), dtype=jnp.float32)
    pe = pe.at[:, 0::2].set(jnp.sin(position * div_term))
    pe = pe.at[:, 1::2].set(jnp.cos(position * div_term))
    # pe.unsqueeze(0).transpose(0, 1) -> shape [max_len, 1, d_model]
    return pe[:, None, :]


def _tpu_generation_params():
    """(target_block_bytes, vmem_limit_bytes_or_None, prefer_even_grid)."""
    kind = ""
    try:
        kind = jax.devices()[0].device_kind.lower()
    except Exception:
        pass
    if "v7" in kind:
        # 3.2 TB/s HBM but only 64 MiB VMEM/TC: big blocks, explicit (modest) limit,
        # and bias toward an even grid so both TensorCores stay busy.
        return 4 * 1024 * 1024, 48 * 1024 * 1024, True
    if "v6" in kind:
        # 1.4 TB/s, 128 MiB VMEM: 4 MiB blocks push the streaming add toward roofline.
        return 4 * 1024 * 1024, 64 * 1024 * 1024, False
    # v5e / unknown: 16 MiB scoped-VMEM default -> stay at 2 MiB blocks.
    return 2 * 1024 * 1024, None, False


def _round_up(n: int, m: int) -> int:
    return -(-n // m) * m


def _choose_seq_tile(seq_len: int, row_bytes: int, target_bytes: int,
                     mult: int, prefer_even_grid: bool) -> int:
    """Rows of x per grid step (aligned to `mult`), targeting ~target_bytes blocks."""
    ts = max(1, target_bytes // max(row_bytes, 1))
    if ts >= seq_len:
        # Whole sequence fits in one block.  On v7x split 2-way (if alignment
        # allows) so both TensorCores get a block.
        if prefer_even_grid and seq_len >= 2 * mult:
            return min(seq_len, _round_up(-(-seq_len // 2), mult))
        return seq_len
    ts = min(seq_len, max(mult, (ts // mult) * mult))
    if prefer_even_grid:
        nsteps = -(-seq_len // ts)
        if 1 < nsteps < 16 and nsteps % 2 == 1:
            # Odd small grid leaves one v7x core a block short; rebalance.
            ts_alt = _round_up(-(-seq_len // (nsteps + 1)), mult)
            if 0 < ts_alt <= ts:
                ts = ts_alt
    return ts


def _pos_enc_kernel_3d(x_ref, pe_ref, o_ref):
    # x_ref / o_ref: (ts, tb, d_model); pe_ref: (ts, d_model) (middle dim squeezed).
    pe = pe_ref[...].astype(x_ref.dtype)                 # free VPU cast in a DMA-bound kernel
    o_ref[...] = (x_ref[...] + pe[:, None, :]).astype(o_ref.dtype)


def _pos_enc_kernel_2d(x_ref, pe_ref, o_ref, *, batch: int):
    # x_ref / o_ref: (ts, batch * d_model); pe_ref: (ts, d_model).
    # The flattened row is [x[b=0,:], x[b=1,:], ...], so tiling pe `batch` times
    # along the lane axis lines up exactly with the broadcast-over-batch add.
    pe = pe_ref[...].astype(x_ref.dtype)
    pe_row = jnp.tile(pe, (1, batch)) if batch > 1 else pe
    o_ref[...] = (x_ref[...] + pe_row).astype(o_ref.dtype)


def positional_encoding_forward(x: jnp.ndarray, pe: jnp.ndarray) -> jnp.ndarray:
    """
    Args:
      x:  [seq_len, batch, d_model]
      pe: [max_len, 1, d_model]  (sinusoidal buffer, float32, max_len >= seq_len)
    Returns:
      x + pe[:seq_len]  with shape [seq_len, batch, d_model] and dtype of x.
    """
    seq_len, batch, d_model = x.shape
    max_len = pe.shape[0]
    assert pe.shape == (max_len, 1, d_model) and max_len >= seq_len

    x_itemsize = jnp.dtype(x.dtype).itemsize
    pe_itemsize = jnp.dtype(pe.dtype).itemsize
    target_bytes, vmem_limit, prefer_even = _tpu_generation_params()

    cost = pl.CostEstimate(
        flops=seq_len * batch * d_model,
        transcendentals=0,
        bytes_accessed=(2 * seq_len * batch * d_model * x_itemsize
                        + seq_len * d_model * pe_itemsize),
    )

    if d_model % 128 == 0:
        # --- 3-D path: lane-dense last dim = d_model, pe broadcast over sublanes. ---
        full_row_bytes = batch * d_model * x_itemsize
        if full_row_bytes <= target_bytes:
            tb = batch
            ts = _choose_seq_tile(seq_len, full_row_bytes, target_bytes,
                                  mult=1, prefer_even_grid=prefer_even)
        else:
            # Wide rows: tile the batch axis too (multiple of 8 sublanes) so
            # double-buffered in + out blocks stay under scoped VMEM on every chip.
            tb = (target_bytes // (8 * d_model * x_itemsize)) // 8 * 8
            tb = min(batch, max(8, tb))
            ts = min(seq_len, max(1, target_bytes // (tb * d_model * x_itemsize)))
        grid = (pl.cdiv(seq_len, ts), pl.cdiv(batch, tb))

        return pl.pallas_call(
            _pos_enc_kernel_3d,
            out_shape=jax.ShapeDtypeStruct((seq_len, batch, d_model), x.dtype),
            grid_spec=pltpu.PrefetchScalarGridSpec(
                num_scalar_prefetch=0,
                grid=grid,
                in_specs=[
                    pl.BlockSpec((ts, tb, d_model), lambda i, j: (i, j, 0)),
                    pl.BlockSpec((ts, pl.Squeezed(), d_model), lambda i, j: (i, 0, 0)),
                ],
                out_specs=pl.BlockSpec((ts, tb, d_model), lambda i, j: (i, j, 0)),
            ),
            compiler_params=pltpu.CompilerParams(
                dimension_semantics=("parallel", "parallel"),
                vmem_limit_bytes=vmem_limit,
            ),
            cost_estimate=cost,
        )(x, pe)

    # --- Fallback path (d_model not a multiple of 128): lane-dense flatten. ---
    bd = batch * d_model
    sub = max(8, 32 // x_itemsize)  # dtype-aware sublane packing: f32->8, bf16->16, int8->32
    ts = _choose_seq_tile(seq_len, bd * x_itemsize, target_bytes,
                          mult=sub, prefer_even_grid=prefer_even)
    # TODO(synk): if batch*d_model*itemsize ever exceeds the block target here
    # (batch >~ 4K at small d_model), add a second grid axis tiling the batch.
    x2d = x.reshape(seq_len, bd)  # contiguous reshape: layout-only, lane-dense output

    out2d = pl.pallas_call(
        functools.partial(_pos_enc_kernel_2d, batch=batch),
        out_shape=jax.ShapeDtypeStruct((seq_len, bd), x.dtype),
        grid_spec=pltpu.PrefetchScalarGridSpec(
            num_scalar_prefetch=0,
            grid=(pl.cdiv(seq_len, ts),),
            in_specs=[
                pl.BlockSpec((ts, bd), lambda i: (i, 0)),
                pl.BlockSpec((ts, pl.Squeezed(), d_model), lambda i: (i, 0, 0)),
            ],
            out_specs=pl.BlockSpec((ts, bd), lambda i: (i, 0)),
        ),
        compiler_params=pltpu.CompilerParams(
            dimension_semantics=("parallel",),
            vmem_limit_bytes=vmem_limit,
        ),
        cost_estimate=cost,
    )(x2d, pe)
    return out2d.reshape(seq_len, batch, d_model)


if __name__ == "__main__":
    key = jax.random.PRNGKey(0)

    # Case 1: small d_model (< 128) -> flattened lane-dense path.
    seq_len, batch, d_model = 8, 2, 32
    pe = make_positional_encoding_table(d_model, max_len=64)        # [64, 1, 32]
    x = jax.random.normal(key, (seq_len, batch, d_model), dtype=jnp.float32)
    out = jax.block_until_ready(positional_encoding_forward(x, pe))
    ref = x + pe[:seq_len]
    assert out.shape == (seq_len, batch, d_model)
    assert out.dtype == x.dtype
    assert jnp.allclose(out, ref, atol=1e-6), "mismatch vs reference (2-D path)"

    # Case 2: d_model multiple of 128 -> 3-D sublane-broadcast path.
    seq_len2, batch2, d_model2 = 16, 4, 128
    pe2 = make_positional_encoding_table(d_model2, max_len=64)      # [64, 1, 128]
    x2 = jax.random.normal(jax.random.PRNGKey(0),
                           (seq_len2, batch2, d_model2), dtype=jnp.float32)
    out2 = jax.block_until_ready(positional_encoding_forward(x2, pe2))
    ref2 = x2 + pe2[:seq_len2]
    assert out2.shape == (seq_len2, batch2, d_model2)
    assert out2.dtype == x2.dtype
    assert jnp.allclose(out2, ref2, atol=1e-6), "mismatch vs reference (3-D path)"

    print("KERNEL_OK")
</pallas_src>

<mosaic_0001>
module attributes {stable_mosaic.version = 11 : i64} {
  func.func @_pos_enc_kernel_2d(%arg0: i32, %arg1: memref<8x64xf32, #tpu.memory_space<vmem>>, %arg2: memref<8x1x32xf32, #tpu.memory_space<vmem>>, %arg3: memref<8x64xf32, #tpu.memory_space<vmem>>) attributes {dimension_semantics = [#tpu.dimension_semantics<parallel>], iteration_bounds = array<i64: 1>, scalar_prefetch = 0 : i64, scratch_operands = 0 : i64, tpu.core_type = #tpu.core_type<tc>, window_params = [{transform_indices = @transform_0, window_bounds = array<i64: 8, 64>}, {transform_indices = @transform_1, window_bounds = array<i64: 8, 1, 32>}, {transform_indices = @transform_2, window_bounds = array<i64: 8, 64>}]} {
    %c0 = arith.constant 0 : index
    %c0_0 = arith.constant 0 : index
    %c0_1 = arith.constant 0 : index
    %0 = vector.load %arg2[%c0, %c0_0, %c0_1] : memref<8x1x32xf32, #tpu.memory_space<vmem>>, vector<8x1x32xf32>
    %1 = vector.shape_cast %0 : vector<8x1x32xf32> to vector<8x32xf32>
    %2 = tpu.concatenate %1, %1 in 1 : vector<8x32xf32>, vector<8x32xf32> -> vector<8x64xf32>
    %c0_2 = arith.constant 0 : index
    %c0_3 = arith.constant 0 : index
    %3 = vector.load %arg1[%c0_2, %c0_3] : memref<8x64xf32, #tpu.memory_space<vmem>>, vector<8x64xf32>
    %4 = arith.addf %3, %2 : vector<8x64xf32>
    %c0_4 = arith.constant 0 : index
    %c0_5 = arith.constant 0 : index
    %5 = vector.load %arg3[%c0_4, %c0_5] : memref<8x64xf32, #tpu.memory_space<vmem>>, vector<8x64xf32>
    tpu.vector_store %arg3[%c0_4, %c0_5], %4 {strides = array<i32>} : memref<8x64xf32, #tpu.memory_space<vmem>>, vector<8x64xf32>,
    return
  }
  func.func @transform_0(%arg0: i32) -> (i32, i32) {
    %c0_i32 = arith.constant 0 : i32
    %c0_i32_0 = arith.constant 0 : i32
    return %arg0, %c0_i32 : i32, i32
  }
  func.func @transform_1(%arg0: i32) -> (i32, i32, i32) {
    %c0_i32 = arith.constant 0 : i32
    %c0_i32_0 = arith.constant 0 : i32
    %c0_i32_1 = arith.constant 0 : i32
    return %arg0, %c0_i32, %c0_i32_0 : i32, i32, i32
  }
  func.func @transform_2(%arg0: i32) -> (i32, i32) {
    %c0_i32 = arith.constant 0 : i32
    %c0_i32_0 = arith.constant 0 : i32
    return %arg0, %c0_i32 : i32, i32
  }
}

</mosaic_0001>

<llo_original>
// kernel: tpu_custom_call.1
$region0: #{tpu_custom_call.1}
  #allocation0 [shape = 'u32[]', space=smem, size = 0x4, offset = 0x4, fixed_abs, tag = 'smem constant byte address 0x4 - core index']
  #allocation1 [shape = 'u32[144,128]{1,0:T(1,128)}', space=vmem, size = 0x12000, scoped, tag = 'internal scratch']
  %s0 = inlined_call_operand.vmem [shape: f32[8,64], index: 0, kind: input, shape index: {}]
  %s1 = inlined_call_operand.vmem [shape: f32[64,1,32], index: 1, kind: input, shape index: {}]
  %s2 = inlined_call_operand.hbm [shape: f32[8,64], index: 2, kind: output, shape index: {}]
  %s3 = sld [smem:[#allocation0]]
  $region18: #{tpu_custom_call.1} parent=0
    _
  %s5 = ssub.s32 1, %s3
  %s6 = scalar_select 0, %s5, %s3
  $region1: #{tpu_custom_call.1} parent=0
    #allocation2 [shape = 'u8[4096]{0}', space=vmem, size = 0x1000, scoped, tag = 'output window, operand 0, single buffered']
    #allocation3 [shape = 's32[1]{0}', space=sflag, size = 0x4, scoped, tag = 'scoped memory for tpu_custom_call.1']
    %7 = vsyncpa [#allocation3], 0
    // Predicated region
    $region2: #{tpu_custom_call.1} parent=1 // pred_check
      _
    $region3: #{tpu_custom_call.1} parent=1 // pred_check_branch
      %9 = sbr.rel (0) target = $region5
    $region4: #{tpu_custom_call.1} parent=1 // pred_region
      _
    $region5: #{tpu_custom_call.1} parent=1 // pred_fallthru
      _
    // Predicated region
    $region6: #{tpu_custom_call.1} parent=1 // pred_check
      _
    $region7: #{tpu_custom_call.1} parent=1 // pred_check_branch
      %11 = sbr.rel (0) target = $region9
    $region8: #{tpu_custom_call.1} parent=1 // pred_region
      _
    $region9: #{tpu_custom_call.1} parent=1 // pred_fallthru
      _
    %v12 = vld [vmem:[%s1] sm:$0x1]
    %v13 = vld [vmem:[%s1 + $0x1] sm:$0x1]
    %v14 = vld [vmem:[%s1 + $0x2] sm:$0x1]
    %v15 = vld [vmem:[%s1 + $0x3] sm:$0x1]
    %v16 = vld [vmem:[%s1 + $0x4] sm:$0x1]
    %v17 = vld [vmem:[%s1 + $0x5] sm:$0x1]
    %v18 = vld [vmem:[%s1 + $0x6] sm:$0x1]
    %v19 = vld [vmem:[%s1 + $0x7] sm:$0x1]
    %v28 = vcombine.low %v12, %v13
    %v29 = vcombine.low %v14, %v15
    %v30 = vcombine.low %v16, %v17
    %v31 = vcombine.low %v18, %v19
    %v33 = vunpack.c.l.s4 1966171168
    %v34 = vunpack.c.0.s8 %v33
    %v35 = vlaneseq
    %v36 = vshrl.u32 %v35, 7
    %v37 = vsub.s32 %v34, %v36
    %v38 = vrot.slane %v28, %v37
    %v40 = vunpack.c.l.s4 1966171168
    %v41 = vunpack.c.0.s8 %v40
    %v42 = vlaneseq
    %v43 = vshrl.u32 %v42, 7
    %v44 = vsub.s32 %v41, %v43
    %v45 = vrot.slane %v29, %v44
    %v47 = vunpack.c.l.s4 1966171168
    %v48 = vunpack.c.0.s8 %v47
    %v49 = vlaneseq
    %v50 = vshrl.u32 %v49, 7
    %v51 = vsub.s32 %v48, %v50
    %v52 = vrot.slane %v30, %v51
    %v54 = vunpack.c.l.s4 1966171168
    %v55 = vunpack.c.0.s8 %v54
    %v56 = vlaneseq
    %v57 = vshrl.u32 %v56, 7
    %v58 = vsub.s32 %v55, %v57
    %v59 = vrot.slane %v31, %v58
    %v60 = vcombine.low %v38, %v45
    %v61 = vcombine.low %v52, %v59
    %v63 = vunpack.c.l.s4 1966171168
    %v64 = vunpack.c.0.s8 %v63
    %v65 = vlaneseq
    %v66 = vshrl.u32 %v65, 7
    %v67 = vsub.s32 %v64, %v66
    %v68 = vrot.slane %v60, %v67
    %v70 = vunpack.c.l.s4 1966171168
    %v71 = vunpack.c.0.s8 %v70
    %v72 = vlaneseq
    %v73 = vshrl.u32 %v72, 7
    %v74 = vsub.s32 %v71, %v73
    %v75 = vrot.slane %v61, %v74
    %v76 = vcombine.low %v68, %v75
    %78 = vrot.lane.b32.xlu0 %v76, 32
    %v79 = vpop.permute.xlu0 %78
    %vm81 = vcmask 261120
    %v82 = vsel %vm81, %v76, %v79
    %v83 = vld [vmem:[%s0] sm:$0xff]
    %v84 = vadd.f32 %v83, %v82
    %vm85 = vcmask 523264
    %86 = vst.msk [vmem:[#allocation2] sm:$0xff] %vm85, %v84
    // Predicated region
    $region10: #{tpu_custom_call.1} parent=1 // pred_check
      _
    $region11: #{tpu_custom_call.1} parent=1 // pred_check_branch
      %88 = sbr.rel (0) target = $region13
    $region12: #{tpu_custom_call.1} parent=1 // pred_region
      %s90 = ssub.s32 128, 128
      %91 = vsyncadd [#allocation3], %s90
      %s93 = sshll.u32 [#allocation2], 4
      %s94 = int_to_ptr.vmem [resolvable:$true] %s93
      %96 = dma.vmem_to_hbm [thread:$0]  %s94, 128, %s2, [#allocation3]
    $region13: #{tpu_custom_call.1} parent=1 // pred_fallthru
      _
    // Predicated region
    $region14: #{tpu_custom_call.1} parent=1 // pred_check
      _
    $region15: #{tpu_custom_call.1} parent=1 // pred_check_branch
      %98 = sbr.rel (0) target = $region17
    $region16: #{tpu_custom_call.1} parent=1 // pred_region
      %99 = dma.done [#allocation3], 128
    $region17: #{tpu_custom_call.1} parent=1 // pred_fallthru
      _
    %100 = vsyncpa [#allocation3], 1

</llo_original>
